<compile_context>
chip_gen: v7x
topology: tpu7x:2x2x1
jax: 0.10.0
libtpu: 0.0.40
codegen_flags: <defaults>
</compile_context>

<pallas_src>
import jax
import jax.numpy as jnp
from jax import lax
from jax.experimental import pallas as pl
from jax.experimental.pallas import tpu as pltpu


def _round_up(x, m):
    return ((x + m - 1) // m) * m


def gru_encoder_kernel(x_ref,      # (T, Hp)    bf16  gathered embedding rows
                       h0_ref,     # (1, Hp)    f32   initial hidden (zero-padded)
                       wih_ref,    # (Hp, 3*Hp) bf16  W_ih^T, gate-blocked
                       whh_ref,    # (Hp, 3*Hp) bf16  W_hh^T, gate-blocked
                       bfold_ref,  # (1, 3*Hp)  f32   b_ih + [b_hh_r, b_hh_z, 0]
                       bhhn_ref,   # (1, Hp)    f32   b_hh_n
                       out_ref,    # (T, Hp)    f32   hidden state after each step
                       gi_ref):    # VMEM scratch (T, 3*Hp) f32
    T, Hp = x_ref.shape

    # ---- Prologue: batched input projection (one M=T MXU matmul). ----
    gi_ref[...] = jnp.dot(x_ref[...], wih_ref[...],
                          preferred_element_type=jnp.float32) + bfold_ref[...]

    whh = whh_ref[...]            # loop-invariant weights / bias
    bhhn = bhhn_ref[...]

    # ---- Recurrence: serial fori_loop; h carried as a value (vregs). ----
    def step(t, h):
        gh = jnp.dot(h.astype(jnp.bfloat16), whh,
                     preferred_element_type=jnp.float32)            # (1, 3Hp)
        gi = gi_ref[pl.ds(t, 1), :]                                 # (1, 3Hp)
        r = jax.nn.sigmoid(gi[:, :Hp] + gh[:, :Hp])
        z = jax.nn.sigmoid(gi[:, Hp:2 * Hp] + gh[:, Hp:2 * Hp])
        # b_hh_n is added to gh_n *before* the r-multiply (torch.nn.GRU).
        n = jnp.tanh(gi[:, 2 * Hp:] + r * (gh[:, 2 * Hp:] + bhhn))
        h_new = (1.0 - z) * n + z * h                               # (1, Hp) f32
        out_ref[pl.ds(t, 1), :] = h_new
        return h_new

    lax.fori_loop(0, T, step, h0_ref[...].astype(jnp.float32))


def prepare_encoder_params(emb_table, w_ih, w_hh, b_ih, b_hh):
    """One-time parameter prep (hoisted out of the per-step / per-call path).

    emb_table: (vocab, H) f32 -> (vocab, Hp) bf16, zero-padded lanes
    w_ih, w_hh: (3H, H)   f32 -> (Hp, 3Hp) bf16, transposed + gate-blocked
    b_ih, b_hh: (3H,)     f32 -> pre-folded (1, 3Hp) f32 and (1, Hp) f32
    with Hp = round_up(H, 128) so every gate block is 128-lane aligned.
    """
    vocab, H = emb_table.shape
    Hp = _round_up(max(H, 1), 128)

    def pack_w(w):
        wT = jnp.transpose(w)                                   # (H, 3H)
        out = jnp.zeros((Hp, 3 * Hp), jnp.bfloat16)
        for g in range(3):
            out = out.at[:H, g * Hp:g * Hp + H].set(
                wT[:, g * H:(g + 1) * H].astype(jnp.bfloat16))
        return out

    def pack_b(b):
        out = jnp.zeros((1, 3 * Hp), jnp.float32)
        for g in range(3):
            out = out.at[0, g * Hp:g * Hp + H].set(
                b[g * H:(g + 1) * H].astype(jnp.float32))
        return out

    emb_p = jnp.zeros((vocab, Hp), jnp.bfloat16).at[:, :H].set(
        emb_table.astype(jnp.bfloat16))
    wihT = pack_w(w_ih)
    whhT = pack_w(w_hh)
    # Fold b_ih plus the reset/update parts of b_hh into the batched gi.
    b_hh_rz = jnp.concatenate([b_hh[:2 * H],
                               jnp.zeros((H,), b_hh.dtype)])
    bfold = pack_b(b_ih) + pack_b(b_hh_rz)
    bhhn = jnp.zeros((1, Hp), jnp.float32).at[0, :H].set(
        b_hh[2 * H:].astype(jnp.float32))
    return emb_p, wihT, whhT, bfold, bhhn


@jax.jit
def encoder_forward_seq(tokens, h0, emb_p, wihT, whhT, bfold, bhhn):
    """Run T encoder GRU steps in ONE pallas_call (no grid, in-kernel loop).

    tokens: (T,) int32; h0: (1, 1, H) f32.
    Returns (xs, h_final): xs (T, H) per-step hidden states, h_final (1, 1, H).
    """
    T = tokens.shape[0]
    H = h0.shape[-1]
    Hp = emb_p.shape[-1]

    # Whole-sequence embedding gather (feeds the batched input projection).
    # TODO(synk): could be replaced by an in-kernel manual DMA gather.
    x = jnp.take(emb_p, tokens.astype(jnp.int32), axis=0)          # (T, Hp) bf16
    h0p = jnp.zeros((1, Hp), jnp.float32).at[:, :H].set(
        h0.reshape(1, H).astype(jnp.float32))

    vmem = pl.BlockSpec(memory_space=pltpu.MemorySpace.VMEM)
    out = pl.pallas_call(
        gru_encoder_kernel,
        out_shape=jax.ShapeDtypeStruct((T, Hp), jnp.float32),
        in_specs=[vmem] * 6,
        out_specs=vmem,
        scratch_shapes=[pltpu.VMEM((T, 3 * Hp), jnp.float32)],
    )(x, h0p, wihT, whhT, bfold, bhhn)

    xs = out[:, :H]                       # crop lane padding
    h_final = xs[-1:].reshape(1, 1, H)    # 1-layer GRU: new hidden == last out
    return xs, h_final


def encoder_forward(token, h, emb_p, wihT, whhT, bfold, bhhn):
    """Single GRU step — exactly Encoder.forward(x, h) from the PyTorch module.

    token: (1,) int32; h: (1, 1, H). Returns (x, h_new), each (1, 1, H)."""
    H = h.shape[-1]
    xs, h_new = encoder_forward_seq(token, h, emb_p, wihT, whhT, bfold, bhhn)
    return xs.reshape(1, 1, H), h_new


# ----------------------------- references -----------------------------------
def mirrored_reference_seq(tokens, h0, emb_p, wihT, whhT, bfold, bhhn, H):
    """Pure-JAX reference mirroring the kernel's mixed precision exactly."""
    Hp = emb_p.shape[-1]
    wih = wihT.astype(jnp.float32)
    whh = whhT.astype(jnp.float32)
    h = jnp.zeros((1, Hp), jnp.float32).at[:, :H].set(
        h0.reshape(1, H).astype(jnp.float32))
    x = jnp.take(emb_p, tokens, axis=0).astype(jnp.float32)
    gi_all = x @ wih + bfold
    outs = []
    for t in range(int(tokens.shape[0])):
        gh = h.astype(jnp.bfloat16).astype(jnp.float32) @ whh
        gi = gi_all[t:t + 1]
        r = jax.nn.sigmoid(gi[:, :Hp] + gh[:, :Hp])
        z = jax.nn.sigmoid(gi[:, Hp:2 * Hp] + gh[:, Hp:2 * Hp])
        n = jnp.tanh(gi[:, 2 * Hp:] + r * (gh[:, 2 * Hp:] + bhhn))
        h = (1.0 - z) * n + z * h
        outs.append(h[:, :H])
    return jnp.concatenate(outs, 0), outs[-1].reshape(1, 1, H)


def torch_reference_seq(tokens, h0, emb_table, w_ih, w_hh, b_ih, b_hh):
    """Full-f32 torch.nn.GRU-style reference (semantic check)."""
    H = emb_table.shape[1]
    h = h0.reshape(1, H).astype(jnp.float32)
    outs = []
    for t in range(int(tokens.shape[0])):
        x = emb_table[tokens[t]].reshape(1, H)
        gi = x @ w_ih.T + b_ih
        gh = h @ w_hh.T + b_hh
        i_r, i_z, i_n = gi[:, :H], gi[:, H:2 * H], gi[:, 2 * H:]
        h_r, h_z, h_n = gh[:, :H], gh[:, H:2 * H], gh[:, 2 * H:]
        r = jax.nn.sigmoid(i_r + h_r)
        z = jax.nn.sigmoid(i_z + h_z)
        n = jnp.tanh(i_n + r * h_n)
        h = (1.0 - z) * n + z * h
        outs.append(h)
    return jnp.concatenate(outs, 0), h.reshape(1, 1, H)


if __name__ == "__main__":
    vocab, hidden, seq_len = 64, 32, 8

    key = jax.random.PRNGKey(0)
    k_emb, k_wih, k_whh, k_bih, k_bhh, k_tok = jax.random.split(key, 6)

    scale = 1.0 / jnp.sqrt(hidden)
    emb_table = jax.random.normal(k_emb, (vocab, hidden), jnp.float32)
    w_ih = jax.random.uniform(k_wih, (3 * hidden, hidden), jnp.float32,
                              -scale, scale)
    w_hh = jax.random.uniform(k_whh, (3 * hidden, hidden), jnp.float32,
                              -scale, scale)
    b_ih = jax.random.uniform(k_bih, (3 * hidden,), jnp.float32, -scale, scale)
    b_hh = jax.random.uniform(k_bhh, (3 * hidden,), jnp.float32, -scale, scale)

    # One-time layout / precision prep (hoisted out of the per-step path).
    params = prepare_encoder_params(emb_table, w_ih, w_hh, b_ih, b_hh)
    h0 = jnp.zeros((1, 1, hidden), jnp.float32)        # Encoder.zero_state()

    # --- Single-step call: matches Encoder.forward(x, h) exactly (T == 1). ---
    token = jnp.array([7], dtype=jnp.int32)
    x1, h1 = encoder_forward(token, h0, *params)
    jax.block_until_ready((x1, h1))
    assert x1.shape == (1, 1, hidden) and h1.shape == (1, 1, hidden)
    assert jnp.allclose(x1, h1), "GRU output and new hidden must be identical"
    x1_mir, _ = mirrored_reference_seq(token, h0, *params, hidden)
    x1_tor, _ = torch_reference_seq(token, h0, emb_table, w_ih, w_hh, b_ih, b_hh)
    assert jnp.allclose(x1.reshape(1, hidden), x1_mir, atol=2e-3), \
        "single-step mismatch vs mirrored (mixed-precision) reference"
    assert jnp.allclose(x1.reshape(1, hidden), x1_tor, atol=5e-2), \
        "single-step mismatch vs f32 torch-style reference"

    # --- Whole-sequence call: T steps in one pallas_call, one in-kernel loop. -
    tokens = jax.random.randint(k_tok, (seq_len,), 0, vocab, dtype=jnp.int32)
    xs, hT = encoder_forward_seq(tokens, h0, *params)
    jax.block_until_ready((xs, hT))
    assert xs.shape == (seq_len, hidden) and hT.shape == (1, 1, hidden)
    xs_mir, hT_mir = mirrored_reference_seq(tokens, h0, *params, hidden)
    xs_tor, hT_tor = torch_reference_seq(tokens, h0, emb_table, w_ih, w_hh,
                                         b_ih, b_hh)
    assert jnp.allclose(xs, xs_mir, atol=2e-3), \
        "sequence mismatch vs mirrored (mixed-precision) reference"
    assert jnp.allclose(hT, hT_mir, atol=2e-3), "final hidden mismatch (mirrored)"
    assert jnp.allclose(xs, xs_tor, atol=5e-2), \
        "sequence mismatch vs f32 torch-style reference"
    assert jnp.allclose(hT, hT_tor, atol=5e-2), "final hidden mismatch (f32 ref)"

    print("KERNEL_OK")
</pallas_src>

<mosaic_0001>
module attributes {stable_mosaic.version = 11 : i64} {
  func.func @gru_encoder_kernel(%arg0: memref<1x128xbf16, #tpu.memory_space<vmem>>, %arg1: memref<1x128xf32, #tpu.memory_space<vmem>>, %arg2: memref<128x384xbf16, #tpu.memory_space<vmem>>, %arg3: memref<128x384xbf16, #tpu.memory_space<vmem>>, %arg4: memref<1x384xf32, #tpu.memory_space<vmem>>, %arg5: memref<1x128xf32, #tpu.memory_space<vmem>>, %arg6: memref<1x128xf32, #tpu.memory_space<vmem>>, %arg7: memref<1x384xf32, #tpu.memory_space<vmem>>) attributes {dimension_semantics = [], scalar_prefetch = 0 : i64, scratch_operands = 1 : i64, tpu.core_type = #tpu.core_type<tc>} {
    %c0 = arith.constant 0 : index
    %c0_0 = arith.constant 0 : index
    %0 = vector.load %arg0[%c0, %c0_0] : memref<1x128xbf16, #tpu.memory_space<vmem>>, vector<1x128xbf16>
    %c0_1 = arith.constant 0 : index
    %c0_2 = arith.constant 0 : index
    %1 = vector.load %arg2[%c0_1, %c0_2] : memref<128x384xbf16, #tpu.memory_space<vmem>>, vector<128x384xbf16>
    %cst = arith.constant dense<0.000000e+00> : vector<1x384xf32>
    %2 = tpu.matmul %0, %1, %cst {dimension_numbers = #tpu.dot_dimension_numbers<[1], [0], [0], [1], [0, 0, 1, 1], [], []>} : vector<1x128xbf16>, vector<128x384xbf16>, vector<1x384xf32> -> vector<1x384xf32>
    %c0_3 = arith.constant 0 : index
    %c0_4 = arith.constant 0 : index
    %3 = vector.load %arg4[%c0_3, %c0_4] : memref<1x384xf32, #tpu.memory_space<vmem>>, vector<1x384xf32>
    %4 = arith.addf %2, %3 : vector<1x384xf32>
    %c0_5 = arith.constant 0 : index
    %c0_6 = arith.constant 0 : index
    %5 = vector.load %arg7[%c0_5, %c0_6] : memref<1x384xf32, #tpu.memory_space<vmem>>, vector<1x384xf32>
    tpu.vector_store %arg7[%c0_5, %c0_6], %4 {strides = array<i32>} : memref<1x384xf32, #tpu.memory_space<vmem>>, vector<1x384xf32>,
    %c0_7 = arith.constant 0 : index
    %c0_8 = arith.constant 0 : index
    %6 = vector.load %arg3[%c0_7, %c0_8] : memref<128x384xbf16, #tpu.memory_space<vmem>>, vector<128x384xbf16>
    %c0_9 = arith.constant 0 : index
    %c0_10 = arith.constant 0 : index
    %7 = vector.load %arg5[%c0_9, %c0_10] : memref<1x128xf32, #tpu.memory_space<vmem>>, vector<1x128xf32>
    %c0_11 = arith.constant 0 : index
    %c0_12 = arith.constant 0 : index
    %8 = vector.load %arg1[%c0_11, %c0_12] : memref<1x128xf32, #tpu.memory_space<vmem>>, vector<1x128xf32>
    %c0_i32 = arith.constant 0 : i32
    %9 = arith.truncf %8 : vector<1x128xf32> to vector<1x128xbf16>
    %cst_13 = arith.constant dense<0.000000e+00> : vector<1x384xf32>
    %10 = tpu.matmul %9, %6, %cst_13 {dimension_numbers = #tpu.dot_dimension_numbers<[1], [0], [0], [1], [0, 0, 1, 1], [], []>} : vector<1x128xbf16>, vector<128x384xbf16>, vector<1x384xf32> -> vector<1x384xf32>
    %11 = arith.index_cast %c0_i32 : i32 to index
    %c0_14 = arith.constant 0 : index
    %12 = vector.load %arg7[%11, %c0_14] : memref<1x384xf32, #tpu.memory_space<vmem>>, vector<1x384xf32>
    %13 = vector.extract_strided_slice %12 {offsets = [0, 0], sizes = [1, 128], strides = [1, 1]} : vector<1x384xf32> to vector<1x128xf32>
    %14 = vector.extract_strided_slice %10 {offsets = [0, 0], sizes = [1, 128], strides = [1, 1]} : vector<1x384xf32> to vector<1x128xf32>
    %15 = arith.addf %13, %14 : vector<1x128xf32>
    %16 = arith.negf %15 : vector<1x128xf32>
    %17 = math.exp %16 : vector<1x128xf32>
    %cst_15 = arith.constant 1.000000e+00 : f32
    %18 = vector.broadcast %cst_15 : f32 to vector<1x128xf32>
    %19 = arith.addf %18, %17 : vector<1x128xf32>
    %20 = arith.divf %18, %19 : vector<1x128xf32>
    %21 = vector.extract_strided_slice %12 {offsets = [0, 128], sizes = [1, 128], strides = [1, 1]} : vector<1x384xf32> to vector<1x128xf32>
    %22 = vector.extract_strided_slice %10 {offsets = [0, 128], sizes = [1, 128], strides = [1, 1]} : vector<1x384xf32> to vector<1x128xf32>
    %23 = arith.addf %21, %22 : vector<1x128xf32>
    %24 = arith.negf %23 : vector<1x128xf32>
    %25 = math.exp %24 : vector<1x128xf32>
    %cst_16 = arith.constant 1.000000e+00 : f32
    %26 = vector.broadcast %cst_16 : f32 to vector<1x128xf32>
    %27 = arith.addf %26, %25 : vector<1x128xf32>
    %28 = arith.divf %26, %27 : vector<1x128xf32>
    %29 = vector.extract_strided_slice %12 {offsets = [0, 256], sizes = [1, 128], strides = [1, 1]} : vector<1x384xf32> to vector<1x128xf32>
    %30 = vector.extract_strided_slice %10 {offsets = [0, 256], sizes = [1, 128], strides = [1, 1]} : vector<1x384xf32> to vector<1x128xf32>
    %31 = arith.addf %30, %7 : vector<1x128xf32>
    %32 = arith.mulf %20, %31 : vector<1x128xf32>
    %33 = arith.addf %29, %32 : vector<1x128xf32>
    %34 = math.tanh %33 : vector<1x128xf32>
    %cst_17 = arith.constant 1.000000e+00 : f32
    %35 = vector.broadcast %cst_17 : f32 to vector<1x128xf32>
    %36 = arith.subf %35, %28 : vector<1x128xf32>
    %37 = arith.mulf %36, %34 : vector<1x128xf32>
    %38 = arith.mulf %28, %8 : vector<1x128xf32>
    %39 = arith.addf %37, %38 : vector<1x128xf32>
    %40 = arith.index_cast %c0_i32 : i32 to index
    %c0_18 = arith.constant 0 : index
    %41 = vector.load %arg6[%40, %c0_18] : memref<1x128xf32, #tpu.memory_space<vmem>>, vector<1x128xf32>
    tpu.vector_store %arg6[%40, %c0_18], %39 {strides = array<i32>} : memref<1x128xf32, #tpu.memory_space<vmem>>, vector<1x128xf32>,
    %c1_i32 = arith.constant 1 : i32
    return
  }
}

</mosaic_0001>

<llo_original>
// kernel: encoder_forward_seq.1
$region0: #{encoder_forward_seq.1}
  #allocation0 [shape = 'u32[]', space=smem, size = 0x4, offset = 0x4, fixed_abs, tag = 'smem constant byte address 0x4 - core index']
  #allocation1 [shape = 'u32[144,128]{1,0:T(1,128)}', space=vmem, size = 0x12000, scoped, tag = 'internal scratch']
  #allocation2 [shape = 'f32[1,384]{1,0:T(1,128)}', space=vmem, size = 0x600, scoped, tag = 'scratch operand']
  %s0 = inlined_call_operand.vmem [shape: bf16[1,128], index: 0, kind: input, shape index: {}]
  %s1 = inlined_call_operand.vmem [shape: f32[1,128], index: 1, kind: input, shape index: {}]
  %s2 = inlined_call_operand.hbm [shape: bf16[128,384], index: 2, kind: input, shape index: {}]
  %s3 = inlined_call_operand.hbm [shape: bf16[128,384], index: 3, kind: input, shape index: {}]
  %s4 = inlined_call_operand.vmem [shape: f32[1,384], index: 4, kind: input, shape index: {}]
  %s5 = inlined_call_operand.vmem [shape: f32[1,128], index: 5, kind: input, shape index: {}]
  %s6 = inlined_call_operand.vmem [shape: f32[1,128], index: 6, kind: output, shape index: {}]
  %s7 = sld [smem:[#allocation0]]
  $region42: #{encoder_forward_seq.1} parent=0
    _
  %s9 = ssub.s32 1, %s7
  %s10 = scalar_select 0, %s9, %s7
  $region1: #{encoder_forward_seq.1} parent=0
    #allocation3 [shape = 'u8[98304]{0}', space=vmem, size = 0x18000, scoped, tag = 'input window, operand 2, single buffered']
    #allocation4 [shape = 's32[1]{0}', space=sflag, size = 0x4, scoped, tag = 'scoped memory for encoder_forward_seq.1']
    #allocation5 [shape = 'u8[98304]{0}', space=vmem, size = 0x18000, scoped, tag = 'input window, operand 3, single buffered']
    #allocation6 [shape = 's32[1]{0}', space=sflag, size = 0x4, scoped, tag = 'scoped memory for encoder_forward_seq.1']
    %11 = vsyncpa [#allocation4], 0
    %12 = vsyncpa [#allocation6], 0
    // Predicated region
    $region2: #{encoder_forward_seq.1} parent=1 // pred_check
      _
    $region3: #{encoder_forward_seq.1} parent=1 // pred_check_branch
      %14 = sbr.rel (0) target = $region5
    $region4: #{encoder_forward_seq.1} parent=1 // pred_region
      _
    $region5: #{encoder_forward_seq.1} parent=1 // pred_fallthru
      _
    // Predicated region
    $region6: #{encoder_forward_seq.1} parent=1 // pred_check
      _
    $region7: #{encoder_forward_seq.1} parent=1 // pred_check_branch
      %16 = sbr.rel (0) target = $region9
    $region8: #{encoder_forward_seq.1} parent=1 // pred_region
      _
    $region9: #{encoder_forward_seq.1} parent=1 // pred_fallthru
      _
    // Predicated region
    $region10: #{encoder_forward_seq.1} parent=1 // pred_check
      _
    $region11: #{encoder_forward_seq.1} parent=1 // pred_check_branch
      %18 = sbr.rel (0) target = $region13
    $region12: #{encoder_forward_seq.1} parent=1 // pred_region
      %s20 = ssub.s32 3072, 3072
      %21 = vsyncadd [#allocation4], %s20
      %s22 = sshll.u32 [#allocation3], 4
      %s23 = int_to_ptr.vmem [resolvable:$true] %s22
      %28 = dma.hbm_to_vmem [thread:$0]  %s2, 3072, %s23, [#allocation4], 192, 192, 12
    $region13: #{encoder_forward_seq.1} parent=1 // pred_fallthru
      _
    // Predicated region
    $region14: #{encoder_forward_seq.1} parent=1 // pred_check
      _
    $region15: #{encoder_forward_seq.1} parent=1 // pred_check_branch
      %30 = sbr.rel (0) target = $region17
    $region16: #{encoder_forward_seq.1} parent=1 // pred_region
      %s32 = ssub.s32 3072, 3072
      %33 = vsyncadd [#allocation6], %s32
      %s34 = sshll.u32 [#allocation5], 4
      %s35 = int_to_ptr.vmem [resolvable:$true] %s34
      %40 = dma.hbm_to_vmem [thread:$0]  %s3, 3072, %s35, [#allocation6], 192, 192, 12
    $region17: #{encoder_forward_seq.1} parent=1 // pred_fallthru
      _
    // Predicated region
    $region18: #{encoder_forward_seq.1} parent=1 // pred_check
      _
    $region19: #{encoder_forward_seq.1} parent=1 // pred_check_branch
      %42 = sbr.rel (0) target = $region21
    $region20: #{encoder_forward_seq.1} parent=1 // pred_region
      _
    $region21: #{encoder_forward_seq.1} parent=1 // pred_fallthru
      _
    // Predicated region
    $region22: #{encoder_forward_seq.1} parent=1 // pred_check
      _
    $region23: #{encoder_forward_seq.1} parent=1 // pred_check_branch
      %44 = sbr.rel (0) target = $region25
    $region24: #{encoder_forward_seq.1} parent=1 // pred_region
      _
    $region25: #{encoder_forward_seq.1} parent=1 // pred_fallthru
      _
    // Predicated region
    $region26: #{encoder_forward_seq.1} parent=1 // pred_check
      _
    $region27: #{encoder_forward_seq.1} parent=1 // pred_check_branch
      %46 = sbr.rel (0) target = $region29
    $region28: #{encoder_forward_seq.1} parent=1 // pred_region
      %47 = dma.done [#allocation4], 3072
    $region29: #{encoder_forward_seq.1} parent=1 // pred_fallthru
      _
    // Predicated region
    $region30: #{encoder_forward_seq.1} parent=1 // pred_check
      _
    $region31: #{encoder_forward_seq.1} parent=1 // pred_check_branch
      %49 = sbr.rel (0) target = $region33
    $region32: #{encoder_forward_seq.1} parent=1 // pred_region
      %50 = dma.done [#allocation6], 3072
    $region33: #{encoder_forward_seq.1} parent=1 // pred_fallthru
      _
    %v52 = vld [vmem:[%s0] sm:$0x1]
    %v53 = vld [vmem:[#allocation3] sm:$0xff]
    %v54 = vld [vmem:[#allocation3 + $0x8] sm:$0xf]
    %v55 = vld [vmem:[#allocation3 + $0xc] sm:$0xff]
    %v56 = vld [vmem:[#allocation3 + $0x14] sm:$0xf]
    %v57 = vld [vmem:[#allocation3 + $0x18] sm:$0xff]
    %v58 = vld [vmem:[#allocation3 + $0x20] sm:$0xf]
    %v59 = vld [vmem:[#allocation3 + $0x24] sm:$0xff]
    %v60 = vld [vmem:[#allocation3 + $0x2c] sm:$0xf]
    %v61 = vld [vmem:[#allocation3 + $0x30] sm:$0xff]
    %v62 = vld [vmem:[#allocation3 + $0x38] sm:$0xf]
    %v63 = vld [vmem:[#allocation3 + $0x3c] sm:$0xff]
    %v64 = vld [vmem:[#allocation3 + $0x44] sm:$0xf]
    %v65 = vld [vmem:[#allocation3 + $0x48] sm:$0xff]
    %v66 = vld [vmem:[#allocation3 + $0x50] sm:$0xf]
    %v67 = vld [vmem:[#allocation3 + $0x54] sm:$0xff]
    %v68 = vld [vmem:[#allocation3 + $0x5c] sm:$0xf]
    %v69 = vld [vmem:[#allocation3 + $0x60] sm:$0xff]
    %v70 = vld [vmem:[#allocation3 + $0x68] sm:$0xf]
    %v71 = vld [vmem:[#allocation3 + $0x6c] sm:$0xff]
    %v72 = vld [vmem:[#allocation3 + $0x74] sm:$0xf]
    %v73 = vld [vmem:[#allocation3 + $0x78] sm:$0xff]
    %v74 = vld [vmem:[#allocation3 + $0x80] sm:$0xf]
    %v75 = vld [vmem:[#allocation3 + $0x84] sm:$0xff]
    %v76 = vld [vmem:[#allocation3 + $0x8c] sm:$0xf]
    %v77 = vld [vmem:[#allocation3 + $0x90] sm:$0xff]
    %v78 = vld [vmem:[#allocation3 + $0x98] sm:$0xf]
    %v79 = vld [vmem:[#allocation3 + $0x9c] sm:$0xff]
    %v80 = vld [vmem:[#allocation3 + $0xa4] sm:$0xf]
    %v81 = vld [vmem:[#allocation3 + $0xa8] sm:$0xff]
    %v82 = vld [vmem:[#allocation3 + $0xb0] sm:$0xf]
    %v83 = vld [vmem:[#allocation3 + $0xb4] sm:$0xff]
    %v84 = vld [vmem:[#allocation3 + $0xbc] sm:$0xf]
    %v85 = vld [vmem:[%s4] sm:$0x7]
    %v118 = vunpack.c.l.b16 %v53
    %v119 = vunpack.c.h.b16 %v53
    %v120 = vunpack.c.l.b16 %v54
    %v121 = vunpack.c.l.b16 %v55
    %v122 = vunpack.c.h.b16 %v55
    %v123 = vunpack.c.l.b16 %v56
    %v124 = vunpack.c.l.b16 %v57
    %v125 = vunpack.c.h.b16 %v57
    %v126 = vunpack.c.l.b16 %v58
    %v127 = vunpack.c.l.b16 %v59
    %v128 = vunpack.c.h.b16 %v59
    %v129 = vunpack.c.l.b16 %v60
    %v130 = vunpack.c.l.b16 %v61
    %v131 = vunpack.c.h.b16 %v61
    %v132 = vunpack.c.l.b16 %v62
    %v133 = vunpack.c.l.b16 %v63
    %v134 = vunpack.c.h.b16 %v63
    %v135 = vunpack.c.l.b16 %v64
    %v136 = vunpack.c.l.b16 %v65
    %v137 = vunpack.c.h.b16 %v65
    %v138 = vunpack.c.l.b16 %v66
    %v139 = vunpack.c.l.b16 %v67
    %v140 = vunpack.c.h.b16 %v67
    %v141 = vunpack.c.l.b16 %v68
    %v142 = vunpack.c.l.b16 %v69
    %v143 = vunpack.c.h.b16 %v69
    %v144 = vunpack.c.l.b16 %v70
    %v145 = vunpack.c.l.b16 %v71
    %v146 = vunpack.c.h.b16 %v71
    %v147 = vunpack.c.l.b16 %v72
    %v148 = vunpack.c.l.b16 %v73
    %v149 = vunpack.c.h.b16 %v73
    %v150 = vunpack.c.l.b16 %v74
    %v151 = vunpack.c.l.b16 %v75
    %v152 = vunpack.c.h.b16 %v75
    %v153 = vunpack.c.l.b16 %v76
    %v154 = vunpack.c.l.b16 %v77
    %v155 = vunpack.c.h.b16 %v77
    %v156 = vunpack.c.l.b16 %v78
    %v157 = vunpack.c.l.b16 %v79
    %v158 = vunpack.c.h.b16 %v79
    %v159 = vunpack.c.l.b16 %v80
    %v160 = vunpack.c.l.b16 %v81
    %v161 = vunpack.c.h.b16 %v81
    %v162 = vunpack.c.l.b16 %v82
    %v163 = vunpack.c.l.b16 %v83
    %v164 = vunpack.c.h.b16 %v83
    %v165 = vunpack.c.l.b16 %v84
    %v166 = vpack.c.b16 %v121, %v118
    %v167 = vpack.c.b16 %v122, %v119
    %v168 = vpack.c.b16 %v123, %v120
    %v169 = vpack.c.b16 %v127, %v124
    %v170 = vpack.c.b16 %v128, %v125
    %v171 = vpack.c.b16 %v129, %v126
    %v172 = vpack.c.b16 %v133, %v130
    %v173 = vpack.c.b16 %v134, %v131
    %v174 = vpack.c.b16 %v135, %v132
    %v175 = vpack.c.b16 %v139, %v136
    %v176 = vpack.c.b16 %v140, %v137
    %v177 = vpack.c.b16 %v141, %v138
    %v178 = vpack.c.b16 %v145, %v142
    %v179 = vpack.c.b16 %v146, %v143
    %v180 = vpack.c.b16 %v147, %v144
    %v181 = vpack.c.b16 %v151, %v148
    %v182 = vpack.c.b16 %v152, %v149
    %v183 = vpack.c.b16 %v153, %v150
    %v184 = vpack.c.b16 %v157, %v154
    %v185 = vpack.c.b16 %v158, %v155
    %v186 = vpack.c.b16 %v159, %v156
    %v187 = vpack.c.b16 %v163, %v160
    %v188 = vpack.c.b16 %v164, %v161
    %v189 = vpack.c.b16 %v165, %v162
    %v215 = vlaneseq
    %v216 = vshrl.u32 %v215, 7
    %v217 = vsub.s32 0, %v216
    %v218 = vrot.slane %v85, %v217
    %v219 = vlaneseq
    %v220 = vshrl.u32 %v219, 7
    %v221 = vsub.s32 1, %v220
    %v222 = vrot.slane %v85, %v221
    %v223 = vlaneseq
    %v224 = vshrl.u32 %v223, 7
    %v225 = vsub.s32 2, %v224
    %v226 = vrot.slane %v85, %v225
    %230 = vmatprep.subr.bf16.mxu0 %v167
    %231 = vmatpush1.bf16.msra.mxu0 %v166
    %232 = vmatprep.subr.bf16.mxu0 %v170
    %233 = vmatpush1.bf16.msra.mxu0 %v169
    %234 = vmatprep.subr.bf16.mxu0 %v173
    %235 = vmatpush1.bf16.msra.mxu0 %v172
    %236 = vmatprep.subr.bf16.mxu0 %v176
    %237 = vmatpush1.bf16.msra.mxu0 %v175
    %238 = vmatprep.subr.bf16.mxu0 %v179
    %239 = vmatpush1.bf16.msra.mxu0 %v178
    %240 = vmatprep.subr.bf16.mxu0 %v182
    %241 = vmatpush1.bf16.msra.mxu0 %v181
    %242 = vmatprep.subr.bf16.mxu0 %v185
    %243 = vmatpush1.bf16.msra.mxu0 %v184
    %244 = vmatprep.subr.bf16.mxu0 %v188
    %245 = vmatpush1.bf16.msra.mxu0 %v187
    %246 = vmatprep.subr.bf16.mxu0 0
    %247 = vmatpush1.bf16.msra.mxu0 0
    %248 = vmatprep.subr.bf16.mxu0 0
    %249 = vmatpush1.bf16.msra.mxu0 0
    %250 = vmatprep.subr.bf16.mxu0 0
    %251 = vmatpush1.bf16.msra.mxu0 0
    %252 = vmatprep.subr.bf16.mxu0 0
    %253 = vmatpush1.bf16.msra.mxu0 0
    %254 = vmatprep.subr.bf16.mxu0 0
    %255 = vmatpush1.bf16.msra.mxu0 0
    %256 = vmatprep.subr.bf16.mxu0 0
    %257 = vmatpush1.bf16.msra.mxu0 0
    %258 = vmatprep.subr.bf16.mxu0 0
    %259 = vmatpush1.bf16.msra.mxu0 0
    %260 = vmatprep.subr.bf16.mxu0 0
    %261 = vmatpush1.bf16.msra.mxu0 0
    %262 = vmatprep.mubr.bf16.mxu0 0
    %263 = vmatmul.mubr.bf16.gmra.mrb[0].mxu0 %v52
    %v264 = vpop.f32.mrb[0].mxu0
    %v265 = vadd.f32 %v218, %v264
    %v266 = vpop.f32.mrb[0].mxu0
    %v267 = vadd.f32 %v222, %v266
    %v268 = vpop.f32.mrb[0].mxu0
    %v269 = vpop.f32.mrb[0].mxu0
    %270 = vdwg.mxu0
    %271 = vmatprep.subr.bf16.mxu0 0
    %272 = vmatpush1.bf16.msra.mxu0 %v168
    %273 = vmatprep.subr.bf16.mxu0 0
    %274 = vmatpush1.bf16.msra.mxu0 %v171
    %275 = vmatprep.subr.bf16.mxu0 0
    %276 = vmatpush1.bf16.msra.mxu0 %v174
    %277 = vmatprep.subr.bf16.mxu0 0
    %278 = vmatpush1.bf16.msra.mxu0 %v177
    %279 = vmatprep.subr.bf16.mxu0 0
    %280 = vmatpush1.bf16.msra.mxu0 %v180
    %281 = vmatprep.subr.bf16.mxu0 0
    %282 = vmatpush1.bf16.msra.mxu0 %v183
    %283 = vmatprep.subr.bf16.mxu0 0
    %284 = vmatpush1.bf16.msra.mxu0 %v186
    %285 = vmatprep.subr.bf16.mxu0 0
    %286 = vmatpush1.bf16.msra.mxu0 %v189
    %287 = vmatprep.subr.bf16.mxu0 0
    %288 = vmatpush1.bf16.msra.mxu0 0
    %289 = vmatprep.subr.bf16.mxu0 0
    %290 = vmatpush1.bf16.msra.mxu0 0
    %291 = vmatprep.subr.bf16.mxu0 0
    %292 = vmatpush1.bf16.msra.mxu0 0
    %293 = vmatprep.subr.bf16.mxu0 0
    %294 = vmatpush1.bf16.msra.mxu0 0
    %295 = vmatprep.subr.bf16.mxu0 0
    %296 = vmatpush1.bf16.msra.mxu0 0
    %297 = vmatprep.subr.bf16.mxu0 0
    %298 = vmatpush1.bf16.msra.mxu0 0
    %299 = vmatprep.subr.bf16.mxu0 0
    %300 = vmatpush1.bf16.msra.mxu0 0
    %301 = vmatprep.subr.bf16.mxu0 0
    %302 = vmatpush1.bf16.msra.mxu0 0
    %303 = vmatprep.mubr.bf16.mxu0 0
    %304 = vmatmul.mubr.bf16.gmra.mrb[0].mxu0 %v52
    %v305 = vpop.f32.mrb[0].mxu0
    %v306 = vadd.f32 %v226, %v305
    %v307 = vpop.f32.mrb[0].mxu0
    %v308 = vpop.f32.mrb[0].mxu0
    %v309 = vpop.f32.mrb[0].mxu0
    %310 = vdwg.mxu0
    %v314 = vcombine.low %v265, %v267
    %v316 = vunpack.c.l.s4 1966171168
    %v317 = vunpack.c.0.s8 %v316
    %v318 = vlaneseq
    %v319 = vshrl.u32 %v318, 7
    %v320 = vsub.s32 %v317, %v319
    %v321 = vrot.slane %v314, %v320
    %v323 = vunpack.c.l.s4 1966171168
    %v324 = vunpack.c.0.s8 %v323
    %v325 = vlaneseq
    %v326 = vshrl.u32 %v325, 7
    %v327 = vsub.s32 %v324, %v326
    %v328 = vrot.slane %v306, %v327
    %v329 = vcombine.low %v321, %v328
    %v331 = vunpack.c.l.s4 1966171168
    %v332 = vunpack.c.0.s8 %v331
    %v333 = vlaneseq
    %v334 = vshrl.u32 %v333, 7
    %v335 = vsub.s32 %v332, %v334
    %v336 = vrot.slane %v329, %v335
    %v338 = vlaneseq
    %vm339 = vcmp.ge.s32.totalorder %v338, 0
    %vm340 = vcmp.lt.s32.totalorder %v338, 384
    %vm341 = vmand %vm339, %vm340
    %342 = vst.msk [vmem:[#allocation2] sm:$0x7] %vm341, %v336
    %v343 = vld [vmem:[#allocation5] sm:$0xff]
    %v344 = vld [vmem:[#allocation5 + $0x8] sm:$0xf]
    %v345 = vld [vmem:[#allocation5 + $0xc] sm:$0xff]
    %v346 = vld [vmem:[#allocation5 + $0x14] sm:$0xf]
    %v347 = vld [vmem:[#allocation5 + $0x18] sm:$0xff]
    %v348 = vld [vmem:[#allocation5 + $0x20] sm:$0xf]
    %v349 = vld [vmem:[#allocation5 + $0x24] sm:$0xff]
    %v350 = vld [vmem:[#allocation5 + $0x2c] sm:$0xf]
    %v351 = vld [vmem:[#allocation5 + $0x30] sm:$0xff]
    %v352 = vld [vmem:[#allocation5 + $0x38] sm:$0xf]
    %v353 = vld [vmem:[#allocation5 + $0x3c] sm:$0xff]
    %v354 = vld [vmem:[#allocation5 + $0x44] sm:$0xf]
    %v355 = vld [vmem:[#allocation5 + $0x48] sm:$0xff]
    %v356 = vld [vmem:[#allocation5 + $0x50] sm:$0xf]
    %v357 = vld [vmem:[#allocation5 + $0x54] sm:$0xff]
    %v358 = vld [vmem:[#allocation5 + $0x5c] sm:$0xf]
    %v359 = vld [vmem:[#allocation5 + $0x60] sm:$0xff]
    %v360 = vld [vmem:[#allocation5 + $0x68] sm:$0xf]
    %v361 = vld [vmem:[#allocation5 + $0x6c] sm:$0xff]
    %v362 = vld [vmem:[#allocation5 + $0x74] sm:$0xf]
    %v363 = vld [vmem:[#allocation5 + $0x78] sm:$0xff]
    %v364 = vld [vmem:[#allocation5 + $0x80] sm:$0xf]
    %v365 = vld [vmem:[#allocation5 + $0x84] sm:$0xff]
    %v366 = vld [vmem:[#allocation5 + $0x8c] sm:$0xf]
    %v367 = vld [vmem:[#allocation5 + $0x90] sm:$0xff]
    %v368 = vld [vmem:[#allocation5 + $0x98] sm:$0xf]
    %v369 = vld [vmem:[#allocation5 + $0x9c] sm:$0xff]
    %v370 = vld [vmem:[#allocation5 + $0xa4] sm:$0xf]
    %v371 = vld [vmem:[#allocation5 + $0xa8] sm:$0xff]
    %v372 = vld [vmem:[#allocation5 + $0xb0] sm:$0xf]
    %v373 = vld [vmem:[#allocation5 + $0xb4] sm:$0xff]
    %v374 = vld [vmem:[#allocation5 + $0xbc] sm:$0xf]
    %v375 = vld [vmem:[%s5] sm:$0x1]
    %v376 = vld [vmem:[%s1] sm:$0x1]
    %v377 = vpack.c.bf16 %v376, %v376
    %v410 = vunpack.c.l.b16 %v343
    %v411 = vunpack.c.h.b16 %v343
    %v412 = vunpack.c.l.b16 %v344
    %v413 = vunpack.c.l.b16 %v345
    %v414 = vunpack.c.h.b16 %v345
    %v415 = vunpack.c.l.b16 %v346
    %v416 = vunpack.c.l.b16 %v347
    %v417 = vunpack.c.h.b16 %v347
    %v418 = vunpack.c.l.b16 %v348
    %v419 = vunpack.c.l.b16 %v349
    %v420 = vunpack.c.h.b16 %v349
    %v421 = vunpack.c.l.b16 %v350
    %v422 = vunpack.c.l.b16 %v351
    %v423 = vunpack.c.h.b16 %v351
    %v424 = vunpack.c.l.b16 %v352
    %v425 = vunpack.c.l.b16 %v353
    %v426 = vunpack.c.h.b16 %v353
    %v427 = vunpack.c.l.b16 %v354
    %v428 = vunpack.c.l.b16 %v355
    %v429 = vunpack.c.h.b16 %v355
    %v430 = vunpack.c.l.b16 %v356
    %v431 = vunpack.c.l.b16 %v357
    %v432 = vunpack.c.h.b16 %v357
    %v433 = vunpack.c.l.b16 %v358
    %v434 = vunpack.c.l.b16 %v359
    %v435 = vunpack.c.h.b16 %v359
    %v436 = vunpack.c.l.b16 %v360
    %v437 = vunpack.c.l.b16 %v361
    %v438 = vunpack.c.h.b16 %v361
    %v439 = vunpack.c.l.b16 %v362
    %v440 = vunpack.c.l.b16 %v363
    %v441 = vunpack.c.h.b16 %v363
    %v442 = vunpack.c.l.b16 %v364
    %v443 = vunpack.c.l.b16 %v365
    %v444 = vunpack.c.h.b16 %v365
    %v445 = vunpack.c.l.b16 %v366
    %v446 = vunpack.c.l.b16 %v367
    %v447 = vunpack.c.h.b16 %v367
    %v448 = vunpack.c.l.b16 %v368
    %v449 = vunpack.c.l.b16 %v369
    %v450 = vunpack.c.h.b16 %v369
    %v451 = vunpack.c.l.b16 %v370
    %v452 = vunpack.c.l.b16 %v371
    %v453 = vunpack.c.h.b16 %v371
    %v454 = vunpack.c.l.b16 %v372
    %v455 = vunpack.c.l.b16 %v373
    %v456 = vunpack.c.h.b16 %v373
    %v457 = vunpack.c.l.b16 %v374
    %v458 = vpack.c.b16 %v413, %v410
    %v459 = vpack.c.b16 %v414, %v411
    %v460 = vpack.c.b16 %v415, %v412
    %v461 = vpack.c.b16 %v419, %v416
    %v462 = vpack.c.b16 %v420, %v417
    %v463 = vpack.c.b16 %v421, %v418
    %v464 = vpack.c.b16 %v425, %v422
    %v465 = vpack.c.b16 %v426, %v423
    %v466 = vpack.c.b16 %v427, %v424
    %v467 = vpack.c.b16 %v431, %v428
    %v468 = vpack.c.b16 %v432, %v429
    %v469 = vpack.c.b16 %v433, %v430
    %v470 = vpack.c.b16 %v437, %v434
    %v471 = vpack.c.b16 %v438, %v435
    %v472 = vpack.c.b16 %v439, %v436
    %v473 = vpack.c.b16 %v443, %v440
    %v474 = vpack.c.b16 %v444, %v441
    %v475 = vpack.c.b16 %v445, %v442
    %v476 = vpack.c.b16 %v449, %v446
    %v477 = vpack.c.b16 %v450, %v447
    %v478 = vpack.c.b16 %v451, %v448
    %v479 = vpack.c.b16 %v455, %v452
    %v480 = vpack.c.b16 %v456, %v453
    %v481 = vpack.c.b16 %v457, %v454
    %506 = vmatprep.subr.bf16.mxu0 %v459
    %507 = vmatpush1.bf16.msra.mxu0 %v458
    %508 = vmatprep.subr.bf16.mxu0 %v462
    %509 = vmatpush1.bf16.msra.mxu0 %v461
    %510 = vmatprep.subr.bf16.mxu0 %v465
    %511 = vmatpush1.bf16.msra.mxu0 %v464
    %512 = vmatprep.subr.bf16.mxu0 %v468
    %513 = vmatpush1.bf16.msra.mxu0 %v467
    %514 = vmatprep.subr.bf16.mxu0 %v471
    %515 = vmatpush1.bf16.msra.mxu0 %v470
    %516 = vmatprep.subr.bf16.mxu0 %v474
    %517 = vmatpush1.bf16.msra.mxu0 %v473
    %518 = vmatprep.subr.bf16.mxu0 %v477
    %519 = vmatpush1.bf16.msra.mxu0 %v476
    %520 = vmatprep.subr.bf16.mxu0 %v480
    %521 = vmatpush1.bf16.msra.mxu0 %v479
    %522 = vmatprep.subr.bf16.mxu0 0
    %523 = vmatpush1.bf16.msra.mxu0 0
    %524 = vmatprep.subr.bf16.mxu0 0
    %525 = vmatpush1.bf16.msra.mxu0 0
    %526 = vmatprep.subr.bf16.mxu0 0
    %527 = vmatpush1.bf16.msra.mxu0 0
    %528 = vmatprep.subr.bf16.mxu0 0
    %529 = vmatpush1.bf16.msra.mxu0 0
    %530 = vmatprep.subr.bf16.mxu0 0
    %531 = vmatpush1.bf16.msra.mxu0 0
    %532 = vmatprep.subr.bf16.mxu0 0
    %533 = vmatpush1.bf16.msra.mxu0 0
    %534 = vmatprep.subr.bf16.mxu0 0
    %535 = vmatpush1.bf16.msra.mxu0 0
    %536 = vmatprep.subr.bf16.mxu0 0
    %537 = vmatpush1.bf16.msra.mxu0 0
    %538 = vmatprep.mubr.bf16.mxu0 0
    %539 = vmatmul.mubr.bf16.gmra.mrb[0].mxu0 %v377
    %v540 = vpop.f32.mrb[0].mxu0
    %v541 = vadd.f32 0.0, %v540
    %v542 = vpop.f32.mrb[0].mxu0
    %v543 = vadd.f32 0.0, %v542
    %v544 = vpop.f32.mrb[0].mxu0
    %v545 = vpop.f32.mrb[0].mxu0
    %546 = vdwg.mxu0
    %547 = vmatprep.subr.bf16.mxu0 0
    %548 = vmatpush1.bf16.msra.mxu0 %v460
    %549 = vmatprep.subr.bf16.mxu0 0
    %550 = vmatpush1.bf16.msra.mxu0 %v463
    %551 = vmatprep.subr.bf16.mxu0 0
    %552 = vmatpush1.bf16.msra.mxu0 %v466
    %553 = vmatprep.subr.bf16.mxu0 0
    %554 = vmatpush1.bf16.msra.mxu0 %v469
    %555 = vmatprep.subr.bf16.mxu0 0
    %556 = vmatpush1.bf16.msra.mxu0 %v472
    %557 = vmatprep.subr.bf16.mxu0 0
    %558 = vmatpush1.bf16.msra.mxu0 %v475
    %559 = vmatprep.subr.bf16.mxu0 0
    %560 = vmatpush1.bf16.msra.mxu0 %v478
    %561 = vmatprep.subr.bf16.mxu0 0
    %562 = vmatpush1.bf16.msra.mxu0 %v481
    %563 = vmatprep.subr.bf16.mxu0 0
    %564 = vmatpush1.bf16.msra.mxu0 0
    %565 = vmatprep.subr.bf16.mxu0 0
    %566 = vmatpush1.bf16.msra.mxu0 0
    %567 = vmatprep.subr.bf16.mxu0 0
    %568 = vmatpush1.bf16.msra.mxu0 0
    %569 = vmatprep.subr.bf16.mxu0 0
    %570 = vmatpush1.bf16.msra.mxu0 0
    %571 = vmatprep.subr.bf16.mxu0 0
    %572 = vmatpush1.bf16.msra.mxu0 0
    %573 = vmatprep.subr.bf16.mxu0 0
    %574 = vmatpush1.bf16.msra.mxu0 0
    %575 = vmatprep.subr.bf16.mxu0 0
    %576 = vmatpush1.bf16.msra.mxu0 0
    %577 = vmatprep.subr.bf16.mxu0 0
    %578 = vmatpush1.bf16.msra.mxu0 0
    %579 = vmatprep.mubr.bf16.mxu0 0
    %580 = vmatmul.mubr.bf16.gmra.mrb[0].mxu0 %v377
    %v581 = vpop.f32.mrb[0].mxu0
    %v582 = vadd.f32 0.0, %v581
    %v583 = vpop.f32.mrb[0].mxu0
    %v584 = vpop.f32.mrb[0].mxu0
    %v585 = vpop.f32.mrb[0].mxu0
    %586 = vdwg.mxu0
    %v587 = vld [vmem:[#allocation2] sm:$0x7]
    %v588 = vadd.f32 %v587, %v541
    %v589 = vxor.u32 %v588, 2147483648
    %v590 = vmul.f32 %v589, 1.442695
    %v591 = vpow.pop %v590
    %v592 = vadd.f32 %v591, 1.0
    %v593 = vrcp.pop %v592
    %v594 = vmul.f32 1.0, %v593
    %v596 = vrot.slane %v587, 1
    %v598 = vadd.f32 %v596, %v543
    %v599 = vxor.u32 %v598, 2147483648
    %v600 = vmul.f32 %v599, 1.442695
    %v601 = vpow.pop %v600
    %v602 = vadd.f32 %v601, 1.0
    %v603 = vrcp.pop %v602
    %v604 = vmul.f32 1.0, %v603
    %v605 = vadd.f32 %v582, %v375
    %v606 = vmul.f32 %v594, %v605
    %v607 = vrot.slane %v587, 2
    %v609 = vadd.f32 %v607, %v606
    %v610 = vtanh.pop %v609
    %v611 = vsub.f32 1.0, %v604
    %v612 = vmul.f32 %v611, %v610
    %v613 = vmul.f32 %v604, %v376
    %v614 = vadd.f32 %v612, %v613
    %615 = vst [vmem:[%s6] sm:$0x1] %v614
    // Predicated region
    $region34: #{encoder_forward_seq.1} parent=1 // pred_check
      _
    $region35: #{encoder_forward_seq.1} parent=1 // pred_check_branch
      %617 = sbr.rel (0) target = $region37
    $region36: #{encoder_forward_seq.1} parent=1 // pred_region
      _
    $region37: #{encoder_forward_seq.1} parent=1 // pred_fallthru
      _
    // Predicated region
    $region38: #{encoder_forward_seq.1} parent=1 // pred_check
      _
    $region39: #{encoder_forward_seq.1} parent=1 // pred_check_branch
      %619 = sbr.rel (0) target = $region41
    $region40: #{encoder_forward_seq.1} parent=1 // pred_region
      _
    $region41: #{encoder_forward_seq.1} parent=1 // pred_fallthru
      _
    %620 = vsyncpa [#allocation4], 1
    %621 = vsyncpa [#allocation6], 1

</llo_original>
